<compile_context>
chip_gen: v5e
topology: v5e:2x2
jax: 0.10.0
libtpu: 0.0.40
codegen_flags: <defaults>
</compile_context>

<pallas_src>
import jax
import jax.numpy as jnp
from jax.experimental import pallas as pl
from jax.experimental.pallas import tpu as pltpu

# ---- deterministic "config" constants (stand-ins for cfg.LOSS.* etc.) ----
TEMPERATURE = 0.07
GAMMA_NEG = 4.0   # used via exact x**4 (see kernel); binary targets assumed
GAMMA_POS = 1.0   # used via exact x**1
CLIP = 0.05
EPS = 1e-8


def _asl_tile_kernel(feat_ref, text_t_ref, tgt_ref, cosim_ref, lpart_ref):
    # ----- MXU: [TM, D] x [D, TN] -> f32 logits tile -----------------------
    feat = feat_ref[...]                       # native dtype (bf16 ok)
    text_t = text_t_ref[...]                   # [D, TN], pre-transposed
    logits = jnp.dot(feat, text_t, preferred_element_type=jnp.float32)
    logits = logits * jnp.float32(1.0 / TEMPERATURE)          # [TM, TN] f32
    cosim_ref[...] = logits.astype(cosim_ref.dtype)

    # ----- VPU/EUP: asymmetric loss on the tile -----------------------------
    y = tgt_ref[...].astype(jnp.float32)       # targets       [TM, TN]
    anti = 1.0 - y                             # anti-targets

    xs_pos = jax.nn.sigmoid(logits)
    xs_neg = jnp.minimum(1.0 - xs_pos + jnp.float32(CLIP), 1.0)

    ce = y * jnp.log(jnp.maximum(xs_pos, jnp.float32(EPS)))
    ce = ce + anti * jnp.log(jnp.maximum(xs_neg, jnp.float32(EPS)))

    # asymmetric focusing weight: base**gamma with gamma in {1, 4}.
    # y is 0/1, so base**(gamma_pos*y + gamma_neg*anti) == y*base + anti*base^4
    # exactly -- 2 VPU muls + a select instead of exp(expo*log(base)) on the EUP.
    base = 1.0 - xs_pos * y - xs_neg * anti    # in [0, 1)
    b2 = base * base
    b4 = b2 * b2
    asym_w = y * base + anti * b4

    partial = -jnp.sum(ce * asym_w)            # per-tile scalar (f32)
    # Lane-dense (8,128) partial-sum block; wrapper reads element [0,0].
    lpart_ref[...] = jnp.broadcast_to(partial, lpart_ref.shape).astype(jnp.float32)


def _pick_tile(dim, max_tile, align):
    """Largest t <= max_tile with t % align == 0 and dim % t == 0; else full dim."""
    if dim % align != 0:
        return dim                             # full-extent block is always legal
    t = (min(max_tile, dim) // align) * align
    while t >= align:
        if dim % t == 0:
            return t
        t -= align
    return dim


def classify_anything_multilabel_loss(features, text_features, targets,
                                      *, tm=None, tn=None):
    """Returns ({'classify_anything_loss': scalar}, cosim_matrix [B, C])."""
    B, D = features.shape
    C, D2 = text_features.shape
    assert D == D2
    assert targets.shape == (B, C)

    # Tile sizes: multiples of (8, 128); v7x-friendly defaults (<= ~24 MiB/tile).
    TM = tm if tm is not None else _pick_tile(B, 256, 8)
    TN = tn if tn is not None else _pick_tile(C, 512, 128)
    assert B % TM == 0 and C % TN == 0
    nI, nJ = B // TM, C // TN

    # One-time layout plumbing: contract as [TM,D] x [D,TN] (no in-kernel transpose).
    text_t = text_features.T                   # [D, C]

    f_item = jnp.dtype(features.dtype).itemsize
    t_item = jnp.dtype(text_features.dtype).itemsize
    y_item = jnp.dtype(targets.dtype).itemsize

    # Double-buffered per-tile working set (+ slack); keep within v7x's 64 MiB.
    # TODO(synk): add an inner K grid axis (P3 accumulator) if D grows to >= 2K.
    need = 2 * (TM * D * f_item + D * TN * t_item
                + TM * TN * y_item + TM * TN * 4 + 8 * 128 * 4) + (2 << 20)
    vmem_limit = int(min(max(need, 16 << 20), 64 << 20))

    cost = pl.CostEstimate(
        flops=2 * B * C * D,
        transcendentals=4 * B * C,             # sigmoid (exp+recip) + 2 logs
        bytes_accessed=(B * D * f_item + C * D * t_item
                        + B * C * y_item + B * C * 4 + nI * nJ * 8 * 128 * 4),
    )

    cosim, loss_parts = pl.pallas_call(
        _asl_tile_kernel,
        out_shape=(
            jax.ShapeDtypeStruct((B, C), jnp.float32),           # cosim_matrix
            jax.ShapeDtypeStruct((nI * 8, nJ * 128), jnp.float32),  # per-tile partials
        ),
        grid_spec=pltpu.PrefetchScalarGridSpec(
            num_scalar_prefetch=0,
            # j (C tiles) outer, i (B tiles) inner -> text_t block index is
            # constant across the inner loop, so Pallas skips its re-DMA.
            grid=(nJ, nI),
            in_specs=[
                pl.BlockSpec((TM, D), lambda j, i: (i, 0)),      # features
                pl.BlockSpec((D, TN), lambda j, i: (0, j)),      # text_features.T
                pl.BlockSpec((TM, TN), lambda j, i: (i, j)),     # targets
            ],
            out_specs=(
                pl.BlockSpec((TM, TN), lambda j, i: (i, j)),     # cosim (lane-dense)
                pl.BlockSpec((8, 128), lambda j, i: (i, j)),     # loss partials
            ),
        ),
        compiler_params=pltpu.CompilerParams(
            dimension_semantics=("parallel", "parallel"),
            vmem_limit_bytes=vmem_limit,
        ),
        cost_estimate=cost,
    )(features, text_t, targets)

    # Each (8,128) block holds the same per-tile partial; pick [0,0] of each.
    partials = loss_parts.reshape(nI, 8, nJ, 128)[:, 0, :, 0]
    loss = jnp.sum(partials)
    return {"classify_anything_loss": loss}, cosim


def _reference(features, text_features, targets):
    """Pure-JAX reference mirroring the PyTorch module (uses jnp.power)."""
    logits = (features.astype(jnp.float32)
              @ text_features.astype(jnp.float32).T) / TEMPERATURE
    y = targets.astype(jnp.float32)
    anti = 1.0 - y
    xs_pos = jax.nn.sigmoid(logits)
    xs_neg = jnp.minimum(1.0 - xs_pos + CLIP, 1.0)
    loss = y * jnp.log(jnp.maximum(xs_pos, EPS)) + anti * jnp.log(jnp.maximum(xs_neg, EPS))
    w = jnp.power(1.0 - xs_pos * y - xs_neg * anti, GAMMA_POS * y + GAMMA_NEG * anti)
    return -jnp.sum(loss * w), logits


if __name__ == "__main__":
    key = jax.random.PRNGKey(0)
    kf, kt, ky = jax.random.split(key, 3)

    # Small shapes consistent with the forward (B features, C classes, shared dim D).
    B, C, D = 16, 256, 128
    features = jax.random.normal(kf, (B, D), dtype=jnp.float32)
    text_features = jax.random.normal(kt, (C, D), dtype=jnp.float32)
    targets = (jax.random.uniform(ky, (B, C)) > 0.9).astype(jnp.float32)

    # Small tiles to exercise the multi-tile grid path (grid = (2, 2)).
    out_dict, cosim = classify_anything_multilabel_loss(
        features, text_features, targets, tm=8, tn=128)
    jax.block_until_ready((out_dict["classify_anything_loss"], cosim))

    ref_loss, ref_cosim = _reference(features, text_features, targets)
    assert jnp.allclose(cosim, ref_cosim, rtol=1e-5, atol=1e-4), "cosim mismatch"
    assert jnp.allclose(out_dict["classify_anything_loss"], ref_loss,
                        rtol=1e-4, atol=1e-2), "loss mismatch"

    # Also check the default (auto-tile) path.
    out_dict2, cosim2 = classify_anything_multilabel_loss(features, text_features, targets)
    jax.block_until_ready(out_dict2["classify_anything_loss"])
    assert jnp.allclose(out_dict2["classify_anything_loss"], ref_loss,
                        rtol=1e-4, atol=1e-2), "loss mismatch (auto tiles)"

    print("KERNEL_OK")
</pallas_src>

<mosaic_0001>
module attributes {stable_mosaic.version = 11 : i64} {
  func.func @_asl_tile_kernel(%arg0: i32, %arg1: i32, %arg2: memref<8x128xf32, #tpu.memory_space<vmem>>, %arg3: memref<128x128xf32, #tpu.memory_space<vmem>>, %arg4: memref<8x128xf32, #tpu.memory_space<vmem>>, %arg5: memref<8x128xf32, #tpu.memory_space<vmem>>, %arg6: memref<8x128xf32, #tpu.memory_space<vmem>>) attributes {dimension_semantics = [#tpu.dimension_semantics<parallel>, #tpu.dimension_semantics<parallel>], iteration_bounds = array<i64: 2, 2>, scalar_prefetch = 0 : i64, scratch_operands = 0 : i64, tpu.core_type = #tpu.core_type<tc>, window_params = [{transform_indices = @transform_0, window_bounds = array<i64: 8, 128>}, {transform_indices = @transform_1, window_bounds = array<i64: 128, 128>}, {transform_indices = @transform_2, window_bounds = array<i64: 8, 128>}, {transform_indices = @transform_3, window_bounds = array<i64: 8, 128>}, {transform_indices = @transform_4, window_bounds = array<i64: 8, 128>}]} {
    %c0 = arith.constant 0 : index
    %c0_0 = arith.constant 0 : index
    %0 = vector.load %arg2[%c0, %c0_0] : memref<8x128xf32, #tpu.memory_space<vmem>>, vector<8x128xf32>
    %c0_1 = arith.constant 0 : index
    %c0_2 = arith.constant 0 : index
    %1 = vector.load %arg3[%c0_1, %c0_2] : memref<128x128xf32, #tpu.memory_space<vmem>>, vector<128x128xf32>
    %cst = arith.constant dense<0.000000e+00> : vector<8x128xf32>
    %2 = tpu.matmul %0, %1, %cst {dimension_numbers = #tpu.dot_dimension_numbers<[1], [0], [0], [1], [0, 0, 1, 1], [], []>} : vector<8x128xf32>, vector<128x128xf32>, vector<8x128xf32> -> vector<8x128xf32>
    %cst_3 = arith.constant 14.2857141 : f32
    %3 = vector.broadcast %cst_3 : f32 to vector<8x128xf32>
    %4 = arith.mulf %2, %3 : vector<8x128xf32>
    %c0_4 = arith.constant 0 : index
    %c0_5 = arith.constant 0 : index
    %5 = vector.load %arg5[%c0_4, %c0_5] : memref<8x128xf32, #tpu.memory_space<vmem>>, vector<8x128xf32>
    tpu.vector_store %arg5[%c0_4, %c0_5], %4 {strides = array<i32>} : memref<8x128xf32, #tpu.memory_space<vmem>>, vector<8x128xf32>,
    %c0_6 = arith.constant 0 : index
    %c0_7 = arith.constant 0 : index
    %6 = vector.load %arg4[%c0_6, %c0_7] : memref<8x128xf32, #tpu.memory_space<vmem>>, vector<8x128xf32>
    %cst_8 = arith.constant 1.000000e+00 : f32
    %7 = vector.broadcast %cst_8 : f32 to vector<8x128xf32>
    %8 = arith.subf %7, %6 : vector<8x128xf32>
    %9 = arith.negf %4 : vector<8x128xf32>
    %10 = math.exp %9 : vector<8x128xf32>
    %cst_9 = arith.constant 1.000000e+00 : f32
    %11 = vector.broadcast %cst_9 : f32 to vector<8x128xf32>
    %12 = arith.addf %11, %10 : vector<8x128xf32>
    %13 = arith.divf %11, %12 : vector<8x128xf32>
    %cst_10 = arith.constant 1.000000e+00 : f32
    %14 = vector.broadcast %cst_10 : f32 to vector<8x128xf32>
    %15 = arith.subf %14, %13 : vector<8x128xf32>
    %cst_11 = arith.constant 5.000000e-02 : f32
    %16 = vector.broadcast %cst_11 : f32 to vector<8x128xf32>
    %17 = arith.addf %15, %16 : vector<8x128xf32>
    %cst_12 = arith.constant 1.000000e+00 : f32
    %18 = vector.broadcast %cst_12 : f32 to vector<8x128xf32>
    %19 = arith.minimumf %17, %18 : vector<8x128xf32>
    %cst_13 = arith.constant 9.99999993E-9 : f32
    %20 = vector.broadcast %cst_13 : f32 to vector<8x128xf32>
    %21 = arith.maximumf %13, %20 : vector<8x128xf32>
    %22 = math.log %21 : vector<8x128xf32>
    %23 = arith.mulf %6, %22 : vector<8x128xf32>
    %cst_14 = arith.constant 9.99999993E-9 : f32
    %24 = vector.broadcast %cst_14 : f32 to vector<8x128xf32>
    %25 = arith.maximumf %19, %24 : vector<8x128xf32>
    %26 = math.log %25 : vector<8x128xf32>
    %27 = arith.mulf %8, %26 : vector<8x128xf32>
    %28 = arith.addf %23, %27 : vector<8x128xf32>
    %29 = arith.mulf %13, %6 : vector<8x128xf32>
    %cst_15 = arith.constant 1.000000e+00 : f32
    %30 = vector.broadcast %cst_15 : f32 to vector<8x128xf32>
    %31 = arith.subf %30, %29 : vector<8x128xf32>
    %32 = arith.mulf %19, %8 : vector<8x128xf32>
    %33 = arith.subf %31, %32 : vector<8x128xf32>
    %34 = arith.mulf %33, %33 : vector<8x128xf32>
    %35 = arith.mulf %34, %34 : vector<8x128xf32>
    %36 = arith.mulf %6, %33 : vector<8x128xf32>
    %37 = arith.mulf %8, %35 : vector<8x128xf32>
    %38 = arith.addf %36, %37 : vector<8x128xf32>
    %39 = arith.mulf %28, %38 : vector<8x128xf32>
    %40 = vector.shape_cast %39 : vector<8x128xf32> to vector<1x8x128xf32>
    %cst_16 = arith.constant dense<0.000000e+00> : vector<1xf32>
    %41 = vector.multi_reduction <add>, %40, %cst_16 [1, 2] : vector<1x8x128xf32> to vector<1xf32>
    %42 = vector.shape_cast %41 : vector<1xf32> to vector<1x1x1xf32>
    %43 = vector.extract %42[0, 0, 0] : f32 from vector<1x1x1xf32>
    %cst_17 = arith.constant 0.000000e+00 : f32
    %44 = arith.subf %cst_17, %43 : f32
    %45 = vector.broadcast %44 : f32 to vector<8x128xf32>
    %c0_18 = arith.constant 0 : index
    %c0_19 = arith.constant 0 : index
    %46 = vector.load %arg6[%c0_18, %c0_19] : memref<8x128xf32, #tpu.memory_space<vmem>>, vector<8x128xf32>
    tpu.vector_store %arg6[%c0_18, %c0_19], %45 {strides = array<i32>} : memref<8x128xf32, #tpu.memory_space<vmem>>, vector<8x128xf32>,
    return
  }
  func.func @transform_0(%arg0: i32, %arg1: i32) -> (i32, i32) {
    %c0_i32 = arith.constant 0 : i32
    %c0_i32_0 = arith.constant 0 : i32
    return %arg1, %c0_i32 : i32, i32
  }
  func.func @transform_1(%arg0: i32, %arg1: i32) -> (i32, i32) {
    %c0_i32 = arith.constant 0 : i32
    %c0_i32_0 = arith.constant 0 : i32
    return %c0_i32, %arg0 : i32, i32
  }
  func.func @transform_2(%arg0: i32, %arg1: i32) -> (i32, i32) {
    %c0_i32 = arith.constant 0 : i32
    return %arg1, %arg0 : i32, i32
  }
  func.func @transform_3(%arg0: i32, %arg1: i32) -> (i32, i32) {
    %c0_i32 = arith.constant 0 : i32
    return %arg1, %arg0 : i32, i32
  }
  func.func @transform_4(%arg0: i32, %arg1: i32) -> (i32, i32) {
    %c0_i32 = arith.constant 0 : i32
    return %arg1, %arg0 : i32, i32
  }
}

</mosaic_0001>

<llo_original>
// kernel: tpu_custom_call.1
$region0: #{tpu_custom_call.1}
  #allocation0 [shape = 'u32[]', space=smem, size = 0x4, offset = 0x4, fixed_abs, tag = 'smem constant byte address 0x4 - core index']
  #allocation1 [shape = 'u32[72,128]{1,0:T(1,128)}', space=vmem, size = 0x9000, scoped, tag = 'internal scratch']
  %s0 = inlined_call_operand.hbm [shape: f32[16,128], index: 0, kind: input, shape index: {}]
  %s1 = inlined_call_operand.hbm [shape: f32[128,256], index: 1, kind: input, shape index: {}]
  %s2 = inlined_call_operand.hbm [shape: f32[16,256], index: 2, kind: input, shape index: {}]
  %s3 = inlined_call_operand.hbm [shape: f32[16,256], index: 3, kind: output, shape index: {0}]
  %s4 = inlined_call_operand.hbm [shape: f32[16,256], index: 4, kind: output, shape index: {1}]
  %5 = xla_tuple %s3, %s4
  %s6 = sld [smem:[#allocation0]]
  $region65: #{tpu_custom_call.1} parent=0
    _
  %s8 = ssub.s32 1, %s6
  %s9 = scalar_select 0, %s8, %s6
  $region1: #{tpu_custom_call.1} parent=0
    #allocation2 [shape = 'u8[8192]{0}', space=vmem, size = 0x2000, scoped, tag = 'input window, operand 0']
    #allocation3 [shape = 's32[2]{0}', space=sflag, size = 0x8, scoped, tag = 'scoped memory for tpu_custom_call.1']
    #allocation4 [shape = 's32[2]{0}', space=sflag, size = 0x8, scoped, tag = 'scoped memory for tpu_custom_call.1']
    #allocation5 [shape = 'u8[131072]{0}', space=vmem, size = 0x20000, scoped, tag = 'input window, operand 1']
    #allocation6 [shape = 's32[2]{0}', space=sflag, size = 0x8, scoped, tag = 'scoped memory for tpu_custom_call.1']
    #allocation7 [shape = 'u8[8192]{0}', space=vmem, size = 0x2000, scoped, tag = 'input window, operand 2']
    #allocation8 [shape = 'u8[8192]{0}', space=vmem, size = 0x2000, scoped, tag = 'output window, operand 0']
    #allocation9 [shape = 'u8[8192]{0}', space=vmem, size = 0x2000, scoped, tag = 'output window, operand 1']
    #allocation10 [shape = 's32[2]{0}', space=sflag, size = 0x8, scoped, tag = 'scoped memory for tpu_custom_call.1']
    %10 = vsyncpa [#allocation3], 0
    %s11 = scalar_lea.sflag [#allocation3], 1
    %12 = vsyncpa %s11, 0
    %13 = vsyncpa [#allocation6], 0
    %s14 = scalar_lea.sflag [#allocation6], 1
    %15 = vsyncpa %s14, 0
    %16 = vsyncpa [#allocation4], 0
    %s17 = scalar_lea.sflag [#allocation4], 1
    %18 = vsyncpa %s17, 0
    %19 = vsyncpa [#allocation10], 0
    %s20 = scalar_lea.sflag [#allocation10], 1
    %21 = vsyncpa %s20, 0
    loop: start=0, step=1, limit=6
    $region2: #{tpu_custom_call.1} parent=1 // loop_pre_header
      _
    $region3: #{tpu_custom_call.1} parent=1 // loop_header
      %s23 = sphi 0, %s27
      %p24 = scmp.ge.s32.totalorder %s23, 6
      %s30 = sphi 0, %s42
      %s31 = sphi 0, %s38
      %s32 = sphi 0, %s30
      %s33 = sphi 0, %s31
      %s34 = sphi 0, %s32
      %s35 = sphi 0, %s33
      %s45 = sphi 0, %s47
      %s48 = sphi 0, %s45
      %s49 = sphi 0, %s48
      %s65 = sphi 0, %s49
      %s71 = sphi 0, %s73
      %s74 = sphi 0, %s71
      %s75 = sphi 0, %s74
      %s91 = sphi 0, %s75
      %s99 = sphi 0, %s101
      %s102 = sphi 0, %s99
      %s103 = sphi 0, %s102
      %s119 = sphi 0, %s103
      %s127 = sphi 0, %s129
      %s130 = sphi 0, %s127
      %s131 = sphi 0, %s130
      %s147 = sphi 0, %s131
      %s155 = sphi 0, %s157
      %s158 = sphi 0, %s155
      %s159 = sphi 0, %s158
      %s175 = sphi 0, %s159
    $region4: #{tpu_custom_call.1} parent=1 // loop_header_branch
      %26 = sbr.rel (%p24) target = $region8
    $region5: #{tpu_custom_call.1} parent=1 // loop_body
      %s28 = ssub.s32 %s23, 1
      %s29 = ssub.s32 %s23, 2
      %s36 = sadd.s32 1, %s31
      %p37 = scmp.ge.s32.totalorder %s36, 2
      %s38 = scalar_select %p37, 0, %s36
      %s39 = sadd.s32 1, %s30
      %s40 = scalar_select %p37, %s39, %s30
      %p41 = scmp.ge.s32.totalorder %s40, 2
      %s42 = scalar_select %p41, 0, %s40
      %s43 = ssub.s32 %s31, %s38
      %p44 = scmp.eq.s32.totalorder %s43, 0
      %s46 = sadd.s32 %s45, 1
      %s47 = scalar_select %p44, %s45, %s46
      %p50 = pneg %p44
      %p51 = scmp.eq.s32.totalorder %s23, 3
      %p52 = por %p50, %p51
      %p53 = scmp.ne.s32.totalorder %s45, %s48
      %p54 = scmp.eq.s32.totalorder %s23, 0
      %p55 = por %p53, %p54
      %p56 = scmp.ne.s32.totalorder %s45, %s48
      %p57 = scmp.eq.s32.totalorder %s28, 3
      %p58 = por %p56, %p57
      %p59 = scmp.ne.s32.totalorder %s48, %s49
      %p60 = scmp.eq.s32.totalorder %s28, 0
      %p61 = por %p59, %p60
      %p62 = scmp.ne.s32.totalorder %s48, %s49
      %p63 = scmp.eq.s32.totalorder %s29, 3
      %p64 = por %p62, %p63
      %p66 = scmp.ne.s32.totalorder %s49, %s65
      %p67 = scmp.eq.s32.totalorder %s29, 0
      %p68 = por %p66, %p67
      %s69 = ssub.s32 %s30, %s42
      %p70 = scmp.eq.s32.totalorder %s69, 0
      %s72 = sadd.s32 %s71, 1
      %s73 = scalar_select %p70, %s71, %s72
      %p76 = pneg %p70
      %p77 = scmp.eq.s32.totalorder %s23, 3
      %p78 = por %p76, %p77
      %p79 = scmp.ne.s32.totalorder %s71, %s74
      %p80 = scmp.eq.s32.totalorder %s23, 0
      %p81 = por %p79, %p80
      %p82 = scmp.ne.s32.totalorder %s71, %s74
      %p83 = scmp.eq.s32.totalorder %s28, 3
      %p84 = por %p82, %p83
      %p85 = scmp.ne.s32.totalorder %s74, %s75
      %p86 = scmp.eq.s32.totalorder %s28, 0
      %p87 = por %p85, %p86
      %p88 = scmp.ne.s32.totalorder %s74, %s75
      %p89 = scmp.eq.s32.totalorder %s29, 3
      %p90 = por %p88, %p89
      %p92 = scmp.ne.s32.totalorder %s75, %s91
      %p93 = scmp.eq.s32.totalorder %s29, 0
      %p94 = por %p92, %p93
      %s95 = ssub.s32 %s31, %s38
      %s96 = ssub.s32 %s30, %s42
      %s97 = sor.u32 %s95, %s96
      %p98 = scmp.eq.s32.totalorder %s97, 0
      %s100 = sadd.s32 %s99, 1
      %s101 = scalar_select %p98, %s99, %s100
      %p104 = pneg %p98
      %p105 = scmp.eq.s32.totalorder %s23, 3
      %p106 = por %p104, %p105
      %p107 = scmp.ne.s32.totalorder %s99, %s102
      %p108 = scmp.eq.s32.totalorder %s23, 0
      %p109 = por %p107, %p108
      %p110 = scmp.ne.s32.totalorder %s99, %s102
      %p111 = scmp.eq.s32.totalorder %s28, 3
      %p112 = por %p110, %p111
      %p113 = scmp.ne.s32.totalorder %s102, %s103
      %p114 = scmp.eq.s32.totalorder %s28, 0
      %p115 = por %p113, %p114
      %p116 = scmp.ne.s32.totalorder %s102, %s103
      %p117 = scmp.eq.s32.totalorder %s29, 3
      %p118 = por %p116, %p117
      %p120 = scmp.ne.s32.totalorder %s103, %s119
      %p121 = scmp.eq.s32.totalorder %s29, 0
      %p122 = por %p120, %p121
      %s123 = ssub.s32 %s31, %s38
      %s124 = ssub.s32 %s30, %s42
      %s125 = sor.u32 %s123, %s124
      %p126 = scmp.eq.s32.totalorder %s125, 0
      %s128 = sadd.s32 %s127, 1
      %s129 = scalar_select %p126, %s127, %s128
      %p132 = pneg %p126
      %p133 = scmp.eq.s32.totalorder %s23, 3
      %p134 = por %p132, %p133
      %p135 = scmp.ne.s32.totalorder %s127, %s130
      %p136 = scmp.eq.s32.totalorder %s23, 0
      %p137 = por %p135, %p136
      %p138 = scmp.ne.s32.totalorder %s127, %s130
      %p139 = scmp.eq.s32.totalorder %s28, 3
      %p140 = por %p138, %p139
      %p141 = scmp.ne.s32.totalorder %s130, %s131
      %p142 = scmp.eq.s32.totalorder %s28, 0
      %p143 = por %p141, %p142
      %p144 = scmp.ne.s32.totalorder %s130, %s131
      %p145 = scmp.eq.s32.totalorder %s29, 3
      %p146 = por %p144, %p145
      %p148 = scmp.ne.s32.totalorder %s131, %s147
      %p149 = scmp.eq.s32.totalorder %s29, 0
      %p150 = por %p148, %p149
      %s151 = ssub.s32 %s31, %s38
      %s152 = ssub.s32 %s30, %s42
      %s153 = sor.u32 %s151, %s152
      %p154 = scmp.eq.s32.totalorder %s153, 0
      %s156 = sadd.s32 %s155, 1
      %s157 = scalar_select %p154, %s155, %s156
      %p160 = pneg %p154
      %p161 = scmp.eq.s32.totalorder %s23, 3
      %p162 = por %p160, %p161
      %p163 = scmp.ne.s32.totalorder %s155, %s158
      %p164 = scmp.eq.s32.totalorder %s23, 0
      %p165 = por %p163, %p164
      %p166 = scmp.ne.s32.totalorder %s155, %s158
      %p167 = scmp.eq.s32.totalorder %s28, 3
      %p168 = por %p166, %p167
      %p169 = scmp.ne.s32.totalorder %s158, %s159
      %p170 = scmp.eq.s32.totalorder %s28, 0
      %p171 = por %p169, %p170
      %p172 = scmp.ne.s32.totalorder %s158, %s159
      %p173 = scmp.eq.s32.totalorder %s29, 3
      %p174 = por %p172, %p173
      %p176 = scmp.ne.s32.totalorder %s159, %s175
      %p177 = scmp.eq.s32.totalorder %s29, 0
      %p178 = por %p176, %p177
      %p179 = scmp.le.s32.totalorder 1, %s23
      %p180 = scmp.lt.s32.totalorder %s23, 5
      %p181 = pnand %p179, %p180
      %p182 = pneg %p181
      // Predicated region
      $region9: #{tpu_custom_call.1} parent=5 // pred_check
        _
      $region10: #{tpu_custom_call.1} parent=5 // pred_check_branch
        %184 = sbr.rel (%p181) target = $region12
      $region11: #{tpu_custom_call.1} parent=5 // pred_region
        %s185 = ssub.s32 %s23, 1
      $region12: #{tpu_custom_call.1} parent=5 // pred_fallthru
        _
      %p186 = scmp.lt.s32.totalorder %s23, 4
      // Predicated region
      $region13: #{tpu_custom_call.1} parent=5 // pred_check
        %p187 = pneg %p186
      $region14: #{tpu_custom_call.1} parent=5 // pred_check_branch
        %189 = sbr.rel (%p187) target = $region16
      $region15: #{tpu_custom_call.1} parent=5 // pred_region
        // Predicated region
        $region17: #{tpu_custom_call.1} parent=15 // pred_check
          %p190 = pneg %p55
        $region18: #{tpu_custom_call.1} parent=15 // pred_check_branch
          %192 = sbr.rel (%p190) target = $region20
        $region19: #{tpu_custom_call.1} parent=15 // pred_region
          %s193 = sand.u32 %s45, 1
          %s194 = scalar_lea.sflag [#allocation3], %s193
          %s195 = sand.u32 %s45, 1
          %s196 = smul.addr %s195, 8
          %s197 = scalar_lea.vmem [#allocation2], %s196
          %199 = vsyncadd %s194, 0
          %s200 = smul.addr %s31, 8
          %s201 = scalar_lea.hbm %s0, %s200
          %s203 = sshll.u32 %s201, 4
          %s204 = int_to_ptr.hbm [resolvable:$true] %s203
          %s205 = sshll.u32 %s197, 4
          %s206 = int_to_ptr.vmem [resolvable:$true] %s205
          %208 = dma.hbm_to_vmem [thread:$0]  %s204, 128, %s206, %s194
        $region20: #{tpu_custom_call.1} parent=15 // pred_fallthru
          _
        // Predicated region
        $region21: #{tpu_custom_call.1} parent=15 // pred_check
          %p209 = pneg %p81
        $region22: #{tpu_custom_call.1} parent=15 // pred_check_branch
          %211 = sbr.rel (%p209) target = $region24
        $region23: #{tpu_custom_call.1} parent=15 // pred_region
          %s212 = sand.u32 %s23, 1
          %s213 = scalar_lea.sflag [#allocation6], %s212
          %s214 = sand.u32 %s71, 1
          %s215 = smul.addr %s214, 128
          %s216 = scalar_lea.vmem [#allocation5], %s215
          %218 = vsyncadd %s213, 0
          %s219 = smul.addr %s30, 8
          %s220 = scalar_lea.hbm %s1, %s219
          %s221 = sshll.u32 %s220, 4
          %s222 = int_to_ptr.hbm [resolvable:$true] %s221
          %s223 = sshll.u32 %s216, 4
          %s224 = int_to_ptr.vmem [resolvable:$true] %s223
          %229 = dma.hbm_to_vmem [thread:$0]  %s222, 2048, %s224, %s213, 256, 128, 8
        $region24: #{tpu_custom_call.1} parent=15 // pred_fallthru
          _
        // Predicated region
        $region25: #{tpu_custom_call.1} parent=15 // pred_check
          %p230 = pneg %p109
        $region26: #{tpu_custom_call.1} parent=15 // pred_check_branch
          %232 = sbr.rel (%p230) target = $region28
        $region27: #{tpu_custom_call.1} parent=15 // pred_region
          %s233 = sand.u32 %s23, 1
          %s234 = scalar_lea.sflag [#allocation6], %s233
          %s235 = sand.u32 %s99, 1
          %s236 = smul.addr %s235, 8
          %s237 = scalar_lea.vmem [#allocation7], %s236
          %239 = vsyncadd %s234, 0
          %s240 = smul.addr %s31, 2
          %s241 = sadd.s32 %s30, %s240
          %s242 = smul.addr %s241, 8
          %s243 = scalar_lea.hbm %s2, %s242
          %s245 = sshll.u32 %s243, 4
          %s246 = int_to_ptr.hbm [resolvable:$true] %s245
          %s247 = sshll.u32 %s237, 4
          %s248 = int_to_ptr.vmem [resolvable:$true] %s247
          %250 = dma.hbm_to_vmem [thread:$0]  %s246, 128, %s248, %s234
        $region28: #{tpu_custom_call.1} parent=15 // pred_fallthru
          _
      $region16: #{tpu_custom_call.1} parent=5 // pred_fallthru
        _
      %p251 = scmp.le.s32.totalorder 1, %s23
      %p252 = scmp.lt.s32.totalorder %s23, 5
      %p253 = pnand %p251, %p252
      %p254 = pneg %p253
      // Predicated region
      $region29: #{tpu_custom_call.1} parent=5 // pred_check
        _
      $region30: #{tpu_custom_call.1} parent=5 // pred_check_branch
        %256 = sbr.rel (%p253) target = $region32
      $region31: #{tpu_custom_call.1} parent=5 // pred_region
        %s257 = ssub.s32 %s23, 1
        %s258 = sand.u32 %s48, 1
        %s259 = scalar_lea.sflag [#allocation3], %s258
        %s260 = sand.u32 %s48, 1
        %s261 = smul.addr %s260, 8
        %s262 = scalar_lea.vmem [#allocation2], %s261
        // Predicated region
        $region33: #{tpu_custom_call.1} parent=31 // pred_check
          %p263 = pneg %p61
        $region34: #{tpu_custom_call.1} parent=31 // pred_check_branch
          %265 = sbr.rel (%p263) target = $region36
        $region35: #{tpu_custom_call.1} parent=31 // pred_region
          %267 = dma.done %s259, 128
        $region36: #{tpu_custom_call.1} parent=31 // pred_fallthru
          _
        %s268 = sand.u32 %s28, 1
        %s269 = scalar_lea.sflag [#allocation6], %s268
        %s270 = sand.u32 %s74, 1
        %s271 = smul.addr %s270, 128
        %s272 = scalar_lea.vmem [#allocation5], %s271
        // Predicated region
        $region37: #{tpu_custom_call.1} parent=31 // pred_check
          %p273 = pneg %p87
        $region38: #{tpu_custom_call.1} parent=31 // pred_check_branch
          %275 = sbr.rel (%p273) target = $region40
        $region39: #{tpu_custom_call.1} parent=31 // pred_region
          %277 = dma.done %s269, 2048
        $region40: #{tpu_custom_call.1} parent=31 // pred_fallthru
          _
        %s278 = sand.u32 %s28, 1
        %s279 = scalar_lea.sflag [#allocation6], %s278
        %s280 = sand.u32 %s102, 1
        %s281 = smul.addr %s280, 8
        %s282 = scalar_lea.vmem [#allocation7], %s281
        // Predicated region
        $region41: #{tpu_custom_call.1} parent=31 // pred_check
          %p283 = pneg %p115
        $region42: #{tpu_custom_call.1} parent=31 // pred_check_branch
          %285 = sbr.rel (%p283) target = $region44
        $region43: #{tpu_custom_call.1} parent=31 // pred_region
          %287 = dma.done %s279, 128
        $region44: #{tpu_custom_call.1} parent=31 // pred_fallthru
          _
        %s288 = sand.u32 %s48, 1
        %s289 = scalar_lea.sflag [#allocation3], %s288
        %s290 = sand.u32 %s48, 1
        %s291 = smul.addr %s290, 8
        %s292 = scalar_lea.vmem [#allocation2], %s291
        %p293 = pneg %p61
        %p294 = pneg %p58
        %s295 = sand.u32 %s28, 1
        %s296 = scalar_lea.sflag [#allocation6], %s295
        %s297 = sand.u32 %s74, 1
        %s298 = smul.addr %s297, 128
        %s299 = scalar_lea.vmem [#allocation5], %s298
        %p300 = pneg %p87
        %p301 = pneg %p84
        %s302 = sand.u32 %s28, 1
        %s303 = scalar_lea.sflag [#allocation6], %s302
        %s304 = sand.u32 %s102, 1
        %s305 = smul.addr %s304, 8
        %s306 = scalar_lea.vmem [#allocation7], %s305
        %p307 = pneg %p115
        %p308 = pneg %p112
        %p309 = pneg %p143
        %p310 = pneg %p140
        %s311 = sand.u32 %s130, 1
        %s312 = scalar_lea.sflag [#allocation4], %s311
        %s313 = sand.u32 %s130, 1
        %s314 = smul.addr %s313, 8
        %s315 = scalar_lea.vmem [#allocation8], %s314
        %p316 = pneg %p171
        %p317 = pneg %p168
        %s318 = sand.u32 %s158, 1
        %s319 = scalar_lea.sflag [#allocation10], %s318
        %s320 = sand.u32 %s158, 1
        %s321 = smul.addr %s320, 8
        %s322 = scalar_lea.vmem [#allocation9], %s321
        %v323 = vld [vmem:[%s262] sm:$0xff]
        %v324 = vld [vmem:[%s272] sm:$0xff]
        %v325 = vld [vmem:[%s272 + $0x8] sm:$0xff]
        %v326 = vld [vmem:[%s272 + $0x10] sm:$0xff]
        %v327 = vld [vmem:[%s272 + $0x18] sm:$0xff]
        %v328 = vld [vmem:[%s272 + $0x20] sm:$0xff]
        %v329 = vld [vmem:[%s272 + $0x28] sm:$0xff]
        %v330 = vld [vmem:[%s272 + $0x30] sm:$0xff]
        %v331 = vld [vmem:[%s272 + $0x38] sm:$0xff]
        %v332 = vld [vmem:[%s272 + $0x40] sm:$0xff]
        %v333 = vld [vmem:[%s272 + $0x48] sm:$0xff]
        %v334 = vld [vmem:[%s272 + $0x50] sm:$0xff]
        %v335 = vld [vmem:[%s272 + $0x58] sm:$0xff]
        %v336 = vld [vmem:[%s272 + $0x60] sm:$0xff]
        %v337 = vld [vmem:[%s272 + $0x68] sm:$0xff]
        %v338 = vld [vmem:[%s272 + $0x70] sm:$0xff]
        %v339 = vld [vmem:[%s272 + $0x78] sm:$0xff]
        %340 = vmatpush.msra.mxu0 %v339
        %341 = vmatpush.msra.mxu0 %v338
        %342 = vmatpush.msra.mxu0 %v337
        %343 = vmatpush.msra.mxu0 %v336
        %344 = vmatpush.msra.mxu0 %v335
        %345 = vmatpush.msra.mxu0 %v334
        %346 = vmatpush.msra.mxu0 %v333
        %347 = vmatpush.msra.mxu0 %v332
        %348 = vmatpush.msra.mxu0 %v331
        %349 = vmatpush.msra.mxu0 %v330
        %350 = vmatpush.msra.mxu0 %v329
        %351 = vmatpush.msra.mxu0 %v328
        %352 = vmatpush.msra.mxu0 %v327
        %353 = vmatpush.msra.mxu0 %v326
        %354 = vmatpush.msra.mxu0 %v325
        %355 = vmatpush.msra.mxu0 %v324
        %356 = vmatmul.f32.gmra.mxu0 %v323
        %v357 = vpop.f32.mrf.mxu0
        %v358 = vadd.f32 0.0, %v357
        %359 = vdwg.mxu0
        %v360 = vmul.f32 %v358, 14.285714
        %361 = vst [vmem:[%s315] sm:$0xff] %v360
        %v362 = vld [vmem:[%s282] sm:$0xff]
        %v363 = vsub.f32 1.0, %v362
        %v364 = vxor.u32 %v360, 2147483648
        %v365 = vmul.f32 %v364, 1.442695
        %v366 = vpow.pop %v365
        %v367 = vadd.f32 %v366, 1.0
        %v368 = vrcp.pop %v367
        %v369 = vmul.f32 %v367, %v368
        %v370 = vsub.f32 1.0, %v369
        %v371 = vmul.f32 %v368, %v370
        %v372 = vadd.f32 %v368, %v371
        %vm373 = vweird.f32 %v367
        %vm374 = vweird.f32 %v368
        %vm375 = vmor %vm373, %vm374
        %v376 = vsel %vm375, %v368, %v372
        %v377 = vand.u32 2147483647, %v367
        %vm378 = vcmp.eq.f32.partialorder %v377, 8.507059e+37
        %v379 = vand.u32 %v367, 2147483648
        %v380 = vor.u32 1.1754944e-38, %v379
        %v381 = vsel %vm378, %v380, %v376
        %v382 = vmul.f32 1.0, %v381
        %v383 = vsub.f32 1.0, %v382
        %v384 = vadd.f32 %v383, 0.05
        %v385 = vmin.f32 %v384, 1.0
        %v386 = vmax.f32 %v382, 1e-08
        %v387 = vlog2.pop %v386
        %v388 = vmul.f32 %v387, 0.6931472
        %v389 = vmul.f32 %v362, %v388
        %v390 = vmax.f32 %v385, 1e-08
        %v391 = vlog2.pop %v390
        %v392 = vmul.f32 %v391, 0.6931472
        %v393 = vmul.f32 %v363, %v392
        %v394 = vadd.f32 %v389, %v393
        %v395 = vmul.f32 %v382, %v362
        %v396 = vsub.f32 1.0, %v395
        %v397 = vmul.f32 %v385, %v363
        %v398 = vsub.f32 %v396, %v397
        %v399 = vmul.f32 %v398, %v398
        %v400 = vmul.f32 %v399, %v399
        %v401 = vmul.f32 %v362, %v398
        %v402 = vmul.f32 %v363, %v400
        %v403 = vadd.f32 %v401, %v402
        %v404 = vmul.f32 %v394, %v403
        %405 = vadd.xlane.f32.xlu0 %v404
        %v406 = vpop.xlane.xlu0 %405
        %v407 = vrot.slane %v406, 4
        %v408 = vadd.f32 %v406, %v407
        %v409 = vrot.slane %v408, 2
        %v410 = vadd.f32 %v408, %v409
        %v411 = vrot.slane %v410, 1
        %v412 = vadd.f32 %v410, %v411
        %s413 = vtos %v412
        %s414 = ssub.f32 0.0, %s413
        %v415 = vstv %s414
        %416 = vst [vmem:[%s322] sm:$0xff] %v415
        %s417 = sand.u32 %s130, 1
        %s418 = scalar_lea.sflag [#allocation4], %s417
        %s419 = sand.u32 %s130, 1
        %s420 = smul.addr %s419, 8
        %s421 = scalar_lea.vmem [#allocation8], %s420
        %s422 = sand.u32 %s158, 1
        %s423 = scalar_lea.sflag [#allocation10], %s422
        %s424 = sand.u32 %s158, 1
        %s425 = smul.addr %s424, 8
        %s426 = scalar_lea.vmem [#allocation9], %s425
        // Predicated region
        $region45: #{tpu_custom_call.1} parent=31 // pred_check
          %p427 = pneg %p140
        $region46: #{tpu_custom_call.1} parent=31 // pred_check_branch
          %429 = sbr.rel (%p427) target = $region48
        $region47: #{tpu_custom_call.1} parent=31 // pred_region
          %431 = vsyncadd %s418, 0
          %s432 = smul.addr %s33, 2
          %s433 = sadd.s32 %s32, %s432
          %s434 = smul.addr %s433, 8
          %s435 = scalar_lea.hbm %s3, %s434
          %s437 = sshll.u32 %s421, 4
          %s438 = int_to_ptr.vmem [resolvable:$true] %s437
          %s439 = sshll.u32 %s435, 4
          %s440 = int_to_ptr.hbm [resolvable:$true] %s439
          %442 = dma.vmem_to_hbm [thread:$0]  %s438, 128, %s440, %s418
        $region48: #{tpu_custom_call.1} parent=31 // pred_fallthru
          _
        // Predicated region
        $region49: #{tpu_custom_call.1} parent=31 // pred_check
          %p443 = pneg %p168
        $region50: #{tpu_custom_call.1} parent=31 // pred_check_branch
          %445 = sbr.rel (%p443) target = $region52
        $region51: #{tpu_custom_call.1} parent=31 // pred_region
          %447 = vsyncadd %s423, 0
          %s448 = smul.addr %s33, 2
          %s449 = sadd.s32 %s32, %s448
          %s450 = smul.addr %s449, 8
          %s451 = scalar_lea.hbm %s4, %s450
          %s453 = sshll.u32 %s426, 4
          %s454 = int_to_ptr.vmem [resolvable:$true] %s453
          %s455 = sshll.u32 %s451, 4
          %s456 = int_to_ptr.hbm [resolvable:$true] %s455
          %458 = dma.vmem_to_hbm [thread:$0]  %s454, 128, %s456, %s423
        $region52: #{tpu_custom_call.1} parent=31 // pred_fallthru
          _
      $region32: #{tpu_custom_call.1} parent=5 // pred_fallthru
        _
      %p459 = scmp.le.s32.totalorder 2, %s23
      // Predicated region
      $region53: #{tpu_custom_call.1} parent=5 // pred_check
        %p460 = pneg %p459
      $region54: #{tpu_custom_call.1} parent=5 // pred_check_branch
        %462 = sbr.rel (%p460) target = $region56
      $region55: #{tpu_custom_call.1} parent=5 // pred_region
        %s463 = ssub.s32 %s23, 2
        // Predicated region
        $region57: #{tpu_custom_call.1} parent=55 // pred_check
          %p464 = pneg %p146
        $region58: #{tpu_custom_call.1} parent=55 // pred_check_branch
          %466 = sbr.rel (%p464) target = $region60
        $region59: #{tpu_custom_call.1} parent=55 // pred_region
          %s467 = sand.u32 %s131, 1
          %s468 = scalar_lea.sflag [#allocation4], %s467
          %s469 = sand.u32 %s131, 1
          %s470 = smul.addr %s469, 8
          %s471 = scalar_lea.vmem [#allocation8], %s470
          %473 = dma.done %s468, 128
        $region60: #{tpu_custom_call.1} parent=55 // pred_fallthru
          _
        // Predicated region
        $region61: #{tpu_custom_call.1} parent=55 // pred_check
          %p474 = pneg %p174
        $region62: #{tpu_custom_call.1} parent=55 // pred_check_branch
          %476 = sbr.rel (%p474) target = $region64
        $region63: #{tpu_custom_call.1} parent=55 // pred_region
          %s477 = sand.u32 %s159, 1
          %s478 = scalar_lea.sflag [#allocation10], %s477
          %s479 = sand.u32 %s159, 1
          %s480 = smul.addr %s479, 8
          %s481 = scalar_lea.vmem [#allocation9], %s480
          %483 = dma.done %s478, 128
        $region64: #{tpu_custom_call.1} parent=55 // pred_fallthru
          _
      $region56: #{tpu_custom_call.1} parent=5 // pred_fallthru
        _
    $region6: #{tpu_custom_call.1} parent=1 // loop_footer
      %s27 = sadd.s32 1, %s23
    $region7: #{tpu_custom_call.1} parent=1 // loop_footer_branch
      %22 = sbr.rel target = $region3
    $region8: #{tpu_custom_call.1} parent=1 // loop_exit
      _
    %484 = vsyncpa [#allocation3], 1
    %s485 = scalar_lea.sflag [#allocation3], 1
    %486 = vsyncpa %s485, 1
    %487 = vsyncpa [#allocation6], 1
    %s488 = scalar_lea.sflag [#allocation6], 1
    %489 = vsyncpa %s488, 1
    %490 = vsyncpa [#allocation4], 1
    %s491 = scalar_lea.sflag [#allocation4], 1
    %492 = vsyncpa %s491, 1
    %493 = vsyncpa [#allocation10], 1
    %s494 = scalar_lea.sflag [#allocation10], 1
    %495 = vsyncpa %s494, 1

</llo_original>
